<compile_context>
chip_gen: v7x
topology: tpu7x:2x2x1
jax: 0.10.0
libtpu: 0.0.40
codegen_flags: <defaults>
</compile_context>

<pallas_src>
import jax
import jax.numpy as jnp
from jax.experimental import pallas as pl
from jax.experimental.pallas import tpu as pltpu


H1 = 128  # 64 + 32 + 32
H2 = 128


def _round_up(x, m):
    return ((x + m - 1) // m) * m


def _policy_kernel(state_ref, w1_ref, b1_ref, w2_ref, b2_ref, wo_ref, bo_ref,
                   out_ref):
    # Weights may be f32 or bf16; matmuls always accumulate in f32 and all
    # elementwise math (bias add, ReLU, tanh) stays in f32 (v5e VPU/EUP have
    # no bf16 path, and it keeps the reference check tight on the f32 path).
    wdt = w1_ref.dtype

    x = state_ref[...].astype(wdt)

    # Fused first layer: relu(x @ W1 + b1) == concat of the three branch MLPs.
    h = jnp.dot(x, w1_ref[...], preferred_element_type=jnp.float32)
    h = jnp.maximum(h + b1_ref[...], 0.0)

    # fc2 + ReLU
    h2 = jnp.dot(h.astype(wdt), w2_ref[...], preferred_element_type=jnp.float32)
    h2 = jnp.maximum(h2 + b2_ref[...], 0.0)

    # fc_out + tanh (tanh goes to the EUP slot; effectively free)
    a = jnp.dot(h2.astype(wdt), wo_ref[...], preferred_element_type=jnp.float32)
    out_ref[...] = jnp.tanh(a + bo_ref[...]).astype(out_ref.dtype)


def fuse_policy_params(raw, state_dim, weight_dtype=jnp.bfloat16):
    """Builds the block-diagonal first-layer weight from per-branch params.

    raw: dict with w11 (wp,64), w12 (ev,32), w13 (cv,32), w2 (128,128),
         wo (128,A) pre-transposed to (in,out); biases b* as (1,out).

    Default weight dtype is bf16 (native MXU rate); biases stay f32.
    """
    wp = state_dim["waypoints"]
    ev = state_dim["ego_vehicle"]
    cv = state_dim["companion_vehicle"]
    D = wp + ev + cv

    w1 = jnp.zeros((D, H1), jnp.float32)
    w1 = w1.at[:wp, 0:64].set(raw["w11"])
    w1 = w1.at[wp:wp + ev, 64:96].set(raw["w12"])
    w1 = w1.at[wp + ev:, 96:128].set(raw["w13"])
    b1 = jnp.concatenate([raw["b11"], raw["b12"], raw["b13"]], axis=-1)

    return dict(
        w1=w1.astype(weight_dtype), b1=b1.astype(jnp.float32),
        w2=raw["w2"].astype(weight_dtype), b2=raw["b2"].astype(jnp.float32),
        wo=raw["wo"].astype(weight_dtype), bo=raw["bo"].astype(jnp.float32),
    )


def _jnp_forward(state, p):
    """Fused pure-jnp path (same math as the kernel) for tiny batches."""
    wdt = p["w1"].dtype
    x = state.astype(wdt)
    h = jnp.maximum(
        jnp.dot(x, p["w1"], preferred_element_type=jnp.float32) + p["b1"], 0.0)
    h2 = jnp.maximum(
        jnp.dot(h.astype(wdt), p["w2"],
                preferred_element_type=jnp.float32) + p["b2"], 0.0)
    a = jnp.dot(h2.astype(wdt), p["wo"],
                preferred_element_type=jnp.float32) + p["bo"]
    return jnp.tanh(a)


def policy_net_forward(state, fused_params, *, block_b=2048,
                       small_batch_fallback=64, state_dtype=None):
    """PolicyNet forward: (B, D) -> (B, action_dim) f32.

    * B <= small_batch_fallback: plain fused jnp path (latency win; the
      pallas_call launch + padding overhead dominates at tiny batches).
    * Otherwise: batch padded to a multiple of the batch tile and gridded
      with a "parallel" axis.  The tile is the largest multiple of 8 that is
      <= block_b AND still yields >= 2 grid blocks (so both TensorCores run
      on v7x); weights stay VMEM-resident via constant index_maps.
    * state_dtype=jnp.bfloat16 halves the dominant HBM read stream.
    """
    B, D = state.shape
    action_dim = fused_params["wo"].shape[1]

    if B <= small_batch_fallback:
        return _jnp_forward(state, fused_params)

    if state_dtype is not None and state.dtype != state_dtype:
        state = state.astype(state_dtype)

    # Batch tile: multiple of 8 rows, capped by block_b, and (when there is
    # enough work) no bigger than half the padded batch so grid >= 2 blocks.
    tb_cap = _round_up(block_b, 8)
    b_pad8 = _round_up(max(B, 8), 8)
    if b_pad8 >= 16:
        half = _round_up((b_pad8 + 1) // 2, 8)
        tb = min(tb_cap, half)
    else:
        tb = min(tb_cap, b_pad8)
    b_pad = _round_up(b_pad8, tb)

    if b_pad != B:
        state = jnp.pad(state, ((0, b_pad - B), (0, 0)))

    grid = (b_pad // tb,)

    def resident(shape):
        # Full-array block, constant block index -> stays in VMEM across the
        # batch grid (no re-DMA per block).
        return pl.BlockSpec(shape, lambda i: (0, 0))

    p = fused_params
    inputs = (state, p["w1"], p["b1"], p["w2"], p["b2"], p["wo"], p["bo"])

    in_specs = [
        pl.BlockSpec((tb, D), lambda i: (i, 0)),      # state: blocked over batch
        resident(p["w1"].shape), resident(p["b1"].shape),
        resident(p["w2"].shape), resident(p["b2"].shape),
        resident(p["wo"].shape), resident(p["bo"].shape),
    ]

    # Only needs raising past the default scoped limit (16 MiB on v5e) when
    # the tile is pushed very large; at tb<=2048 total footprint is ~3 MiB.
    vmem_limit = (64 * 1024 * 1024) if tb > 2048 else None

    out = pl.pallas_call(
        _policy_kernel,
        out_shape=jax.ShapeDtypeStruct((b_pad, action_dim), jnp.float32),
        grid=grid,
        in_specs=in_specs,
        out_specs=pl.BlockSpec((tb, action_dim), lambda i: (i, 0)),
        compiler_params=pltpu.CompilerParams(
            dimension_semantics=("parallel",),
            vmem_limit_bytes=vmem_limit),
    )(*inputs)

    return out[:B]


def _init_linear(key, in_dim, out_dim):
    """Mimics nn.Linear default init U(-1/sqrt(in), 1/sqrt(in)).
    Returns weight pre-transposed to (in, out) and bias as (1, out)."""
    kw, kb = jax.random.split(key)
    bound = 1.0 / jnp.sqrt(jnp.float32(in_dim))
    w = jax.random.uniform(kw, (in_dim, out_dim), jnp.float32, -bound, bound)
    b = jax.random.uniform(kb, (1, out_dim), jnp.float32, -bound, bound)
    return w, b


def _reference_forward(state, raw, state_dim):
    """Pure-JAX reference matching the PyTorch forward()."""
    wp = state_dim["waypoints"]
    ev = state_dim["ego_vehicle"]
    cv = state_dim["companion_vehicle"]
    s_wp = state[:, :wp]
    s_ev = state[:, -(cv + ev):-cv]
    s_vf = state[:, -cv:]
    h = jnp.concatenate([
        jnp.maximum(s_wp @ raw["w11"] + raw["b11"], 0.0),
        jnp.maximum(s_ev @ raw["w12"] + raw["b12"], 0.0),
        jnp.maximum(s_vf @ raw["w13"] + raw["b13"], 0.0),
    ], axis=-1)
    hidden = jnp.maximum(h @ raw["w2"] + raw["b2"], 0.0)
    return jnp.tanh(hidden @ raw["wo"] + raw["bo"])


if __name__ == "__main__":
    # Small, module-consistent shapes.
    state_dim = {"waypoints": 10, "ego_vehicle": 6, "companion_vehicle": 4}
    action_dim = 2
    D = sum(state_dim.values())

    key = jax.random.PRNGKey(0)
    k_state, k_big, k11, k12, k13, k2, ko = jax.random.split(key, 7)

    w11, b11 = _init_linear(k11, state_dim["waypoints"], 64)
    w12, b12 = _init_linear(k12, state_dim["ego_vehicle"], 32)
    w13, b13 = _init_linear(k13, state_dim["companion_vehicle"], 32)
    w2, b2 = _init_linear(k2, H1, H2)
    wo, bo = _init_linear(ko, H2, action_dim)
    raw = dict(w11=w11, b11=b11, w12=w12, b12=b12, w13=w13, b13=b13,
               w2=w2, b2=b2, wo=wo, bo=bo)

    params_f32 = fuse_policy_params(raw, state_dim, weight_dtype=jnp.float32)

    # --- f32 path, tiny batch, FORCING the Pallas kernel --------------------
    batch = 4
    state = jax.random.normal(k_state, (batch, D), jnp.float32)
    action = policy_net_forward(state, params_f32, small_batch_fallback=0)
    action = jax.block_until_ready(action)
    ref = _reference_forward(state, raw, state_dim)
    assert action.shape == (batch, action_dim)
    assert jnp.allclose(action, ref, atol=1e-5, rtol=1e-5)

    # --- same tiny batch via the small-batch jnp fallback (default) ---------
    action_fb = jax.block_until_ready(policy_net_forward(state, params_f32))
    assert jnp.allclose(action_fb, ref, atol=1e-5, rtol=1e-5)

    # --- f32 path, larger batch exercising multi-block grid + padding -------
    big_b = 200
    state_big = jax.random.normal(k_big, (big_b, D), jnp.float32)
    action_big = policy_net_forward(state_big, params_f32, block_b=64)
    action_big = jax.block_until_ready(action_big)
    ref_big = _reference_forward(state_big, raw, state_dim)
    assert action_big.shape == (big_b, action_dim)
    assert jnp.allclose(action_big, ref_big, atol=1e-5, rtol=1e-5)

    # --- default bf16 weights + bf16 state (f32 accumulation), loose tol ----
    params_bf16 = fuse_policy_params(raw, state_dim)  # default bf16 weights
    action_bf16 = policy_net_forward(state_big, params_bf16, block_b=64,
                                     state_dtype=jnp.bfloat16)
    action_bf16 = jax.block_until_ready(action_bf16)
    assert jnp.allclose(action_bf16, ref_big, atol=5e-2, rtol=5e-2)

    print("KERNEL_OK")
</pallas_src>

<mosaic_0001>
module attributes {stable_mosaic.version = 11 : i64} {
  func.func @_policy_kernel(%arg0: i32, %arg1: memref<8x20xf32, #tpu.memory_space<vmem>>, %arg2: memref<20x128xf32, #tpu.memory_space<vmem>>, %arg3: memref<1x128xf32, #tpu.memory_space<vmem>>, %arg4: memref<128x128xf32, #tpu.memory_space<vmem>>, %arg5: memref<1x128xf32, #tpu.memory_space<vmem>>, %arg6: memref<128x2xf32, #tpu.memory_space<vmem>>, %arg7: memref<1x2xf32, #tpu.memory_space<vmem>>, %arg8: memref<8x2xf32, #tpu.memory_space<vmem>>) attributes {dimension_semantics = [#tpu.dimension_semantics<parallel>], iteration_bounds = array<i64: 1>, scalar_prefetch = 0 : i64, scratch_operands = 0 : i64, tpu.core_type = #tpu.core_type<tc>, window_params = [{transform_indices = @transform_0, window_bounds = array<i64: 8, 20>}, {pipeline_mode = #tpu.pipeline_mode<synchronous>, transform_indices = @transform_1, window_bounds = array<i64: 20, 128>}, {pipeline_mode = #tpu.pipeline_mode<synchronous>, transform_indices = @transform_2, window_bounds = array<i64: 1, 128>}, {pipeline_mode = #tpu.pipeline_mode<synchronous>, transform_indices = @transform_3, window_bounds = array<i64: 128, 128>}, {pipeline_mode = #tpu.pipeline_mode<synchronous>, transform_indices = @transform_4, window_bounds = array<i64: 1, 128>}, {pipeline_mode = #tpu.pipeline_mode<synchronous>, transform_indices = @transform_5, window_bounds = array<i64: 128, 2>}, {pipeline_mode = #tpu.pipeline_mode<synchronous>, transform_indices = @transform_6, window_bounds = array<i64: 1, 2>}, {transform_indices = @transform_7, window_bounds = array<i64: 8, 2>}]} {
    %c0 = arith.constant 0 : index
    %c0_0 = arith.constant 0 : index
    %0 = vector.load %arg1[%c0, %c0_0] : memref<8x20xf32, #tpu.memory_space<vmem>>, vector<8x20xf32>
    %c0_1 = arith.constant 0 : index
    %c0_2 = arith.constant 0 : index
    %1 = vector.load %arg2[%c0_1, %c0_2] : memref<20x128xf32, #tpu.memory_space<vmem>>, vector<20x128xf32>
    %cst = arith.constant dense<0.000000e+00> : vector<8x128xf32>
    %2 = tpu.matmul %0, %1, %cst {dimension_numbers = #tpu.dot_dimension_numbers<[1], [0], [0], [1], [0, 0, 1, 1], [], []>} : vector<8x20xf32>, vector<20x128xf32>, vector<8x128xf32> -> vector<8x128xf32>
    %c0_3 = arith.constant 0 : index
    %c0_4 = arith.constant 0 : index
    %3 = vector.load %arg3[%c0_3, %c0_4] : memref<1x128xf32, #tpu.memory_space<vmem>>, vector<1x128xf32>
    %4 = vector.broadcast %3 : vector<1x128xf32> to vector<8x128xf32>
    %5 = arith.addf %2, %4 : vector<8x128xf32>
    %cst_5 = arith.constant 0.000000e+00 : f32
    %6 = vector.broadcast %cst_5 : f32 to vector<8x128xf32>
    %7 = arith.maximumf %5, %6 : vector<8x128xf32>
    %c0_6 = arith.constant 0 : index
    %c0_7 = arith.constant 0 : index
    %8 = vector.load %arg4[%c0_6, %c0_7] : memref<128x128xf32, #tpu.memory_space<vmem>>, vector<128x128xf32>
    %cst_8 = arith.constant dense<0.000000e+00> : vector<8x128xf32>
    %9 = tpu.matmul %7, %8, %cst_8 {dimension_numbers = #tpu.dot_dimension_numbers<[1], [0], [0], [1], [0, 0, 1, 1], [], []>} : vector<8x128xf32>, vector<128x128xf32>, vector<8x128xf32> -> vector<8x128xf32>
    %c0_9 = arith.constant 0 : index
    %c0_10 = arith.constant 0 : index
    %10 = vector.load %arg5[%c0_9, %c0_10] : memref<1x128xf32, #tpu.memory_space<vmem>>, vector<1x128xf32>
    %11 = vector.broadcast %10 : vector<1x128xf32> to vector<8x128xf32>
    %12 = arith.addf %9, %11 : vector<8x128xf32>
    %cst_11 = arith.constant 0.000000e+00 : f32
    %13 = vector.broadcast %cst_11 : f32 to vector<8x128xf32>
    %14 = arith.maximumf %12, %13 : vector<8x128xf32>
    %c0_12 = arith.constant 0 : index
    %c0_13 = arith.constant 0 : index
    %15 = vector.load %arg6[%c0_12, %c0_13] : memref<128x2xf32, #tpu.memory_space<vmem>>, vector<128x2xf32>
    %cst_14 = arith.constant dense<0.000000e+00> : vector<8x2xf32>
    %16 = tpu.matmul %14, %15, %cst_14 {dimension_numbers = #tpu.dot_dimension_numbers<[1], [0], [0], [1], [0, 0, 1, 1], [], []>} : vector<8x128xf32>, vector<128x2xf32>, vector<8x2xf32> -> vector<8x2xf32>
    %c0_15 = arith.constant 0 : index
    %c0_16 = arith.constant 0 : index
    %17 = vector.load %arg7[%c0_15, %c0_16] : memref<1x2xf32, #tpu.memory_space<vmem>>, vector<1x2xf32>
    %18 = vector.broadcast %17 : vector<1x2xf32> to vector<8x2xf32>
    %19 = arith.addf %16, %18 : vector<8x2xf32>
    %20 = math.tanh %19 : vector<8x2xf32>
    %c0_17 = arith.constant 0 : index
    %c0_18 = arith.constant 0 : index
    %21 = vector.load %arg8[%c0_17, %c0_18] : memref<8x2xf32, #tpu.memory_space<vmem>>, vector<8x2xf32>
    tpu.vector_store %arg8[%c0_17, %c0_18], %20 {strides = array<i32>} : memref<8x2xf32, #tpu.memory_space<vmem>>, vector<8x2xf32>,
    return
  }
  func.func @transform_0(%arg0: i32) -> (i32, i32) {
    %c0_i32 = arith.constant 0 : i32
    %c0_i32_0 = arith.constant 0 : i32
    return %arg0, %c0_i32 : i32, i32
  }
  func.func @transform_1(%arg0: i32) -> (i32, i32) {
    %c0_i32 = arith.constant 0 : i32
    %c0_i32_0 = arith.constant 0 : i32
    %c0_i32_1 = arith.constant 0 : i32
    return %c0_i32, %c0_i32_0 : i32, i32
  }
  func.func @transform_2(%arg0: i32) -> (i32, i32) {
    %c0_i32 = arith.constant 0 : i32
    %c0_i32_0 = arith.constant 0 : i32
    %c0_i32_1 = arith.constant 0 : i32
    return %c0_i32, %c0_i32_0 : i32, i32
  }
  func.func @transform_3(%arg0: i32) -> (i32, i32) {
    %c0_i32 = arith.constant 0 : i32
    %c0_i32_0 = arith.constant 0 : i32
    %c0_i32_1 = arith.constant 0 : i32
    return %c0_i32, %c0_i32_0 : i32, i32
  }
  func.func @transform_4(%arg0: i32) -> (i32, i32) {
    %c0_i32 = arith.constant 0 : i32
    %c0_i32_0 = arith.constant 0 : i32
    %c0_i32_1 = arith.constant 0 : i32
    return %c0_i32, %c0_i32_0 : i32, i32
  }
  func.func @transform_5(%arg0: i32) -> (i32, i32) {
    %c0_i32 = arith.constant 0 : i32
    %c0_i32_0 = arith.constant 0 : i32
    %c0_i32_1 = arith.constant 0 : i32
    return %c0_i32, %c0_i32_0 : i32, i32
  }
  func.func @transform_6(%arg0: i32) -> (i32, i32) {
    %c0_i32 = arith.constant 0 : i32
    %c0_i32_0 = arith.constant 0 : i32
    %c0_i32_1 = arith.constant 0 : i32
    return %c0_i32, %c0_i32_0 : i32, i32
  }
  func.func @transform_7(%arg0: i32) -> (i32, i32) {
    %c0_i32 = arith.constant 0 : i32
    %c0_i32_0 = arith.constant 0 : i32
    return %arg0, %c0_i32 : i32, i32
  }
}

</mosaic_0001>

<llo_original>
// kernel: tpu_custom_call.1
$region0: #{tpu_custom_call.1}
  #allocation0 [shape = 'u32[]', space=smem, size = 0x4, offset = 0x4, fixed_abs, tag = 'smem constant byte address 0x4 - core index']
  #allocation1 [shape = 'u32[144,128]{1,0:T(1,128)}', space=vmem, size = 0x12000, scoped, tag = 'internal scratch']
  %s0 = inlined_call_operand.vmem [shape: f32[8,20], index: 0, kind: input, shape index: {}]
  %s1 = inlined_call_operand.hbm [shape: f32[20,128], index: 1, kind: input, shape index: {}]
  %s2 = inlined_call_operand.vmem [shape: f32[1,128], index: 2, kind: input, shape index: {}]
  %s3 = inlined_call_operand.vmem [shape: f32[128,128], index: 3, kind: input, shape index: {}]
  %s4 = inlined_call_operand.vmem [shape: f32[1,128], index: 4, kind: input, shape index: {}]
  %s5 = inlined_call_operand.vmem [shape: f32[128,2], index: 5, kind: input, shape index: {}]
  %s6 = inlined_call_operand.vmem [shape: f32[1,2], index: 6, kind: input, shape index: {}]
  %s7 = inlined_call_operand.vmem [shape: f32[8,2], index: 7, kind: output, shape index: {}]
  %s8 = sld [smem:[#allocation0]]
  $region42: #{tpu_custom_call.1} parent=0
    _
  %s10 = ssub.s32 1, %s8
  %s11 = scalar_select 0, %s10, %s8
  $region1: #{tpu_custom_call.1} parent=0
    #allocation2 [shape = 'u8[12288]{0}', space=vmem, size = 0x3000, scoped, tag = 'input window, operand 1, single buffered']
    #allocation3 [shape = 's32[1]{0}', space=sflag, size = 0x4, scoped, tag = 'scoped memory for tpu_custom_call.1']
    %12 = vsyncpa [#allocation3], 0
    // Predicated region
    $region2: #{tpu_custom_call.1} parent=1 // pred_check
      _
    $region3: #{tpu_custom_call.1} parent=1 // pred_check_branch
      %14 = sbr.rel (0) target = $region5
    $region4: #{tpu_custom_call.1} parent=1 // pred_region
      _
    $region5: #{tpu_custom_call.1} parent=1 // pred_fallthru
      _
    // Predicated region
    $region6: #{tpu_custom_call.1} parent=1 // pred_check
      _
    $region7: #{tpu_custom_call.1} parent=1 // pred_check_branch
      %16 = sbr.rel (0) target = $region9
    $region8: #{tpu_custom_call.1} parent=1 // pred_region
      %s18 = ssub.s32 384, 384
      %19 = vsyncadd [#allocation3], %s18
      %s20 = sshll.u32 [#allocation2], 4
      %s21 = int_to_ptr.vmem [resolvable:$true] %s20
      %26 = dma.hbm_to_vmem [thread:$0]  %s1, 384, %s21, [#allocation3], 128, 128, 8
    $region9: #{tpu_custom_call.1} parent=1 // pred_fallthru
      _
    // Predicated region
    $region10: #{tpu_custom_call.1} parent=1 // pred_check
      _
    $region11: #{tpu_custom_call.1} parent=1 // pred_check_branch
      %28 = sbr.rel (0) target = $region13
    $region12: #{tpu_custom_call.1} parent=1 // pred_region
      _
    $region13: #{tpu_custom_call.1} parent=1 // pred_fallthru
      _
    // Predicated region
    $region14: #{tpu_custom_call.1} parent=1 // pred_check
      _
    $region15: #{tpu_custom_call.1} parent=1 // pred_check_branch
      %30 = sbr.rel (0) target = $region17
    $region16: #{tpu_custom_call.1} parent=1 // pred_region
      _
    $region17: #{tpu_custom_call.1} parent=1 // pred_fallthru
      _
    // Predicated region
    $region18: #{tpu_custom_call.1} parent=1 // pred_check
      _
    $region19: #{tpu_custom_call.1} parent=1 // pred_check_branch
      %32 = sbr.rel (0) target = $region21
    $region20: #{tpu_custom_call.1} parent=1 // pred_region
      _
    $region21: #{tpu_custom_call.1} parent=1 // pred_fallthru
      _
    // Predicated region
    $region22: #{tpu_custom_call.1} parent=1 // pred_check
      _
    $region23: #{tpu_custom_call.1} parent=1 // pred_check_branch
      %34 = sbr.rel (0) target = $region25
    $region24: #{tpu_custom_call.1} parent=1 // pred_region
      _
    $region25: #{tpu_custom_call.1} parent=1 // pred_fallthru
      _
    // Predicated region
    $region26: #{tpu_custom_call.1} parent=1 // pred_check
      _
    $region27: #{tpu_custom_call.1} parent=1 // pred_check_branch
      %36 = sbr.rel (0) target = $region29
    $region28: #{tpu_custom_call.1} parent=1 // pred_region
      _
    $region29: #{tpu_custom_call.1} parent=1 // pred_fallthru
      _
    // Predicated region
    $region30: #{tpu_custom_call.1} parent=1 // pred_check
      _
    $region31: #{tpu_custom_call.1} parent=1 // pred_check_branch
      %38 = sbr.rel (0) target = $region33
    $region32: #{tpu_custom_call.1} parent=1 // pred_region
      %39 = dma.done [#allocation3], 384
    $region33: #{tpu_custom_call.1} parent=1 // pred_fallthru
      _
    %v40 = vld [vmem:[%s0] sm:$0xff]
    %v41 = vld [vmem:[#allocation2] sm:$0xff]
    %v42 = vld [vmem:[#allocation2 + $0x8] sm:$0xff]
    %v43 = vld [vmem:[#allocation2 + $0x10] sm:$0xf]
    %v44 = vld [vmem:[%s2] sm:$0x1]
    %v46 = vlaneseq
    %v47 = vshrl.u32 %v46, 7
    %v48 = vsub.s32 0, %v47
    %v49 = vrot.slane %v44, %v48
    %vm51 = vcmask 162816
    %v53 = vsel %vm51, %v40, 0
    %vm55 = vcmask 1043456
    %v57 = vsel %vm55, %v43, 0
    %59 = vmatprep.subr.mxu0 0.0
    %60 = vmatpush1.msra.mxu0 %v41
    %61 = vmatprep.subr.mxu0 0.0
    %62 = vmatpush1.msra.mxu0 %v42
    %63 = vmatprep.subr.mxu0 0.0
    %64 = vmatpush1.msra.mxu0 %v57
    %65 = vmatprep.subr.mxu0 0.0
    %66 = vmatpush1.msra.mxu0 0.0
    %67 = vmatprep.subr.mxu0 0.0
    %68 = vmatpush1.msra.mxu0 0.0
    %69 = vmatprep.subr.mxu0 0.0
    %70 = vmatpush1.msra.mxu0 0.0
    %71 = vmatprep.subr.mxu0 0.0
    %72 = vmatpush1.msra.mxu0 0.0
    %73 = vmatprep.subr.mxu0 0.0
    %74 = vmatpush1.msra.mxu0 0.0
    %75 = vmatprep.subr.mxu0 0.0
    %76 = vmatpush1.msra.mxu0 0.0
    %77 = vmatprep.subr.mxu0 0.0
    %78 = vmatpush1.msra.mxu0 0.0
    %79 = vmatprep.subr.mxu0 0.0
    %80 = vmatpush1.msra.mxu0 0.0
    %81 = vmatprep.subr.mxu0 0.0
    %82 = vmatpush1.msra.mxu0 0.0
    %83 = vmatprep.subr.mxu0 0.0
    %84 = vmatpush1.msra.mxu0 0.0
    %85 = vmatprep.subr.mxu0 0.0
    %86 = vmatpush1.msra.mxu0 0.0
    %87 = vmatprep.subr.mxu0 0.0
    %88 = vmatpush1.msra.mxu0 0.0
    %89 = vmatprep.subr.mxu0 0.0
    %90 = vmatpush1.msra.mxu0 0.0
    %91 = vmatprep.subr.mxu0 0.0
    %92 = vmatpush1.msra.mxu0 0.0
    %93 = vmatprep.subr.mxu0 0.0
    %94 = vmatpush1.msra.mxu0 0.0
    %95 = vmatprep.subr.mxu0 0.0
    %96 = vmatpush1.msra.mxu0 0.0
    %97 = vmatprep.subr.mxu0 0.0
    %98 = vmatpush1.msra.mxu0 0.0
    %99 = vmatprep.subr.mxu0 0.0
    %100 = vmatpush1.msra.mxu0 0.0
    %101 = vmatprep.subr.mxu0 0.0
    %102 = vmatpush1.msra.mxu0 0.0
    %103 = vmatprep.subr.mxu0 0.0
    %104 = vmatpush1.msra.mxu0 0.0
    %105 = vmatprep.subr.mxu0 0.0
    %106 = vmatpush1.msra.mxu0 0.0
    %107 = vmatprep.subr.mxu0 0.0
    %108 = vmatpush1.msra.mxu0 0.0
    %109 = vmatprep.subr.mxu0 0.0
    %110 = vmatpush1.msra.mxu0 0.0
    %111 = vmatprep.subr.mxu0 0.0
    %112 = vmatpush1.msra.mxu0 0.0
    %113 = vmatprep.subr.mxu0 0.0
    %114 = vmatpush1.msra.mxu0 0.0
    %115 = vmatprep.subr.mxu0 0.0
    %116 = vmatpush1.msra.mxu0 0.0
    %117 = vmatprep.subr.mxu0 0.0
    %118 = vmatpush1.msra.mxu0 0.0
    %119 = vmatprep.subr.mxu0 0.0
    %120 = vmatpush1.msra.mxu0 0.0
    %121 = vmatprep.subr.mxu0 0.0
    %122 = vmatpush1.msra.mxu0 0.0
    %123 = vmatprep.mubr.f32.mxu0 0.0
    %124 = vmatmul.mubr.f32.gmra.mrb[0].mxu0 %v53
    %v125 = vpop.f32.mrb[0].mxu0
    %v126 = vadd.f32 %v49, %v125
    %v127 = vpop.f32.mrb[0].mxu0
    %128 = vdwg.mxu0
    %v129 = vmax.f32 %v126, 0.0
    %v130 = vld [vmem:[%s3] sm:$0xff]
    %v131 = vld [vmem:[%s3 + $0x8] sm:$0xff]
    %v132 = vld [vmem:[%s3 + $0x10] sm:$0xff]
    %v133 = vld [vmem:[%s3 + $0x18] sm:$0xff]
    %v134 = vld [vmem:[%s3 + $0x20] sm:$0xff]
    %v135 = vld [vmem:[%s3 + $0x28] sm:$0xff]
    %v136 = vld [vmem:[%s3 + $0x30] sm:$0xff]
    %v137 = vld [vmem:[%s3 + $0x38] sm:$0xff]
    %v138 = vld [vmem:[%s3 + $0x40] sm:$0xff]
    %v139 = vld [vmem:[%s3 + $0x48] sm:$0xff]
    %v140 = vld [vmem:[%s3 + $0x50] sm:$0xff]
    %v141 = vld [vmem:[%s3 + $0x58] sm:$0xff]
    %v142 = vld [vmem:[%s3 + $0x60] sm:$0xff]
    %v143 = vld [vmem:[%s3 + $0x68] sm:$0xff]
    %v144 = vld [vmem:[%s3 + $0x70] sm:$0xff]
    %v145 = vld [vmem:[%s3 + $0x78] sm:$0xff]
    %v146 = vld [vmem:[%s4] sm:$0x1]
    %v148 = vlaneseq
    %v149 = vshrl.u32 %v148, 7
    %v150 = vsub.s32 0, %v149
    %v151 = vrot.slane %v146, %v150
    %153 = vmatprep.subr.mxu0 0.0
    %154 = vmatpush1.msra.mxu0 %v130
    %155 = vmatprep.subr.mxu0 0.0
    %156 = vmatpush1.msra.mxu0 %v131
    %157 = vmatprep.subr.mxu0 0.0
    %158 = vmatpush1.msra.mxu0 %v132
    %159 = vmatprep.subr.mxu0 0.0
    %160 = vmatpush1.msra.mxu0 %v133
    %161 = vmatprep.subr.mxu0 0.0
    %162 = vmatpush1.msra.mxu0 %v134
    %163 = vmatprep.subr.mxu0 0.0
    %164 = vmatpush1.msra.mxu0 %v135
    %165 = vmatprep.subr.mxu0 0.0
    %166 = vmatpush1.msra.mxu0 %v136
    %167 = vmatprep.subr.mxu0 0.0
    %168 = vmatpush1.msra.mxu0 %v137
    %169 = vmatprep.subr.mxu0 0.0
    %170 = vmatpush1.msra.mxu0 %v138
    %171 = vmatprep.subr.mxu0 0.0
    %172 = vmatpush1.msra.mxu0 %v139
    %173 = vmatprep.subr.mxu0 0.0
    %174 = vmatpush1.msra.mxu0 %v140
    %175 = vmatprep.subr.mxu0 0.0
    %176 = vmatpush1.msra.mxu0 %v141
    %177 = vmatprep.subr.mxu0 0.0
    %178 = vmatpush1.msra.mxu0 %v142
    %179 = vmatprep.subr.mxu0 0.0
    %180 = vmatpush1.msra.mxu0 %v143
    %181 = vmatprep.subr.mxu0 0.0
    %182 = vmatpush1.msra.mxu0 %v144
    %183 = vmatprep.subr.mxu0 0.0
    %184 = vmatpush1.msra.mxu0 %v145
    %185 = vmatprep.subr.mxu0 0.0
    %186 = vmatpush1.msra.mxu0 0.0
    %187 = vmatprep.subr.mxu0 0.0
    %188 = vmatpush1.msra.mxu0 0.0
    %189 = vmatprep.subr.mxu0 0.0
    %190 = vmatpush1.msra.mxu0 0.0
    %191 = vmatprep.subr.mxu0 0.0
    %192 = vmatpush1.msra.mxu0 0.0
    %193 = vmatprep.subr.mxu0 0.0
    %194 = vmatpush1.msra.mxu0 0.0
    %195 = vmatprep.subr.mxu0 0.0
    %196 = vmatpush1.msra.mxu0 0.0
    %197 = vmatprep.subr.mxu0 0.0
    %198 = vmatpush1.msra.mxu0 0.0
    %199 = vmatprep.subr.mxu0 0.0
    %200 = vmatpush1.msra.mxu0 0.0
    %201 = vmatprep.subr.mxu0 0.0
    %202 = vmatpush1.msra.mxu0 0.0
    %203 = vmatprep.subr.mxu0 0.0
    %204 = vmatpush1.msra.mxu0 0.0
    %205 = vmatprep.subr.mxu0 0.0
    %206 = vmatpush1.msra.mxu0 0.0
    %207 = vmatprep.subr.mxu0 0.0
    %208 = vmatpush1.msra.mxu0 0.0
    %209 = vmatprep.subr.mxu0 0.0
    %210 = vmatpush1.msra.mxu0 0.0
    %211 = vmatprep.subr.mxu0 0.0
    %212 = vmatpush1.msra.mxu0 0.0
    %213 = vmatprep.subr.mxu0 0.0
    %214 = vmatpush1.msra.mxu0 0.0
    %215 = vmatprep.subr.mxu0 0.0
    %216 = vmatpush1.msra.mxu0 0.0
    %217 = vmatprep.mubr.f32.mxu0 0.0
    %218 = vmatmul.mubr.f32.gmra.mrb[0].mxu0 %v129
    %v219 = vpop.f32.mrb[0].mxu0
    %v220 = vadd.f32 %v151, %v219
    %v221 = vpop.f32.mrb[0].mxu0
    %222 = vdwg.mxu0
    %v223 = vmax.f32 %v220, 0.0
    %v224 = vld [vmem:[%s5] sm:$0xff]
    %v225 = vld [vmem:[%s5 + $0x8] sm:$0xff]
    %v226 = vld [vmem:[%s5 + $0x10] sm:$0xff]
    %v227 = vld [vmem:[%s5 + $0x18] sm:$0xff]
    %v228 = vld [vmem:[%s5 + $0x20] sm:$0xff]
    %v229 = vld [vmem:[%s5 + $0x28] sm:$0xff]
    %v230 = vld [vmem:[%s5 + $0x30] sm:$0xff]
    %v231 = vld [vmem:[%s5 + $0x38] sm:$0xff]
    %v232 = vld [vmem:[%s5 + $0x40] sm:$0xff]
    %v233 = vld [vmem:[%s5 + $0x48] sm:$0xff]
    %v234 = vld [vmem:[%s5 + $0x50] sm:$0xff]
    %v235 = vld [vmem:[%s5 + $0x58] sm:$0xff]
    %v236 = vld [vmem:[%s5 + $0x60] sm:$0xff]
    %v237 = vld [vmem:[%s5 + $0x68] sm:$0xff]
    %v238 = vld [vmem:[%s5 + $0x70] sm:$0xff]
    %v239 = vld [vmem:[%s5 + $0x78] sm:$0xff]
    %v240 = vld [vmem:[%s6] sm:$0x1]
    %v242 = vlaneseq
    %v243 = vshrl.u32 %v242, 7
    %v244 = vsub.s32 0, %v243
    %v245 = vrot.slane %v240, %v244
    %247 = vmatprep.subr.mxu0 0.0
    %248 = vmatpush1.msra.mxu0 %v224
    %249 = vmatprep.subr.mxu0 0.0
    %250 = vmatpush1.msra.mxu0 %v225
    %251 = vmatprep.subr.mxu0 0.0
    %252 = vmatpush1.msra.mxu0 %v226
    %253 = vmatprep.subr.mxu0 0.0
    %254 = vmatpush1.msra.mxu0 %v227
    %255 = vmatprep.subr.mxu0 0.0
    %256 = vmatpush1.msra.mxu0 %v228
    %257 = vmatprep.subr.mxu0 0.0
    %258 = vmatpush1.msra.mxu0 %v229
    %259 = vmatprep.subr.mxu0 0.0
    %260 = vmatpush1.msra.mxu0 %v230
    %261 = vmatprep.subr.mxu0 0.0
    %262 = vmatpush1.msra.mxu0 %v231
    %263 = vmatprep.subr.mxu0 0.0
    %264 = vmatpush1.msra.mxu0 %v232
    %265 = vmatprep.subr.mxu0 0.0
    %266 = vmatpush1.msra.mxu0 %v233
    %267 = vmatprep.subr.mxu0 0.0
    %268 = vmatpush1.msra.mxu0 %v234
    %269 = vmatprep.subr.mxu0 0.0
    %270 = vmatpush1.msra.mxu0 %v235
    %271 = vmatprep.subr.mxu0 0.0
    %272 = vmatpush1.msra.mxu0 %v236
    %273 = vmatprep.subr.mxu0 0.0
    %274 = vmatpush1.msra.mxu0 %v237
    %275 = vmatprep.subr.mxu0 0.0
    %276 = vmatpush1.msra.mxu0 %v238
    %277 = vmatprep.subr.mxu0 0.0
    %278 = vmatpush1.msra.mxu0 %v239
    %279 = vmatprep.subr.mxu0 0.0
    %280 = vmatpush1.msra.mxu0 0.0
    %281 = vmatprep.subr.mxu0 0.0
    %282 = vmatpush1.msra.mxu0 0.0
    %283 = vmatprep.subr.mxu0 0.0
    %284 = vmatpush1.msra.mxu0 0.0
    %285 = vmatprep.subr.mxu0 0.0
    %286 = vmatpush1.msra.mxu0 0.0
    %287 = vmatprep.subr.mxu0 0.0
    %288 = vmatpush1.msra.mxu0 0.0
    %289 = vmatprep.subr.mxu0 0.0
    %290 = vmatpush1.msra.mxu0 0.0
    %291 = vmatprep.subr.mxu0 0.0
    %292 = vmatpush1.msra.mxu0 0.0
    %293 = vmatprep.subr.mxu0 0.0
    %294 = vmatpush1.msra.mxu0 0.0
    %295 = vmatprep.subr.mxu0 0.0
    %296 = vmatpush1.msra.mxu0 0.0
    %297 = vmatprep.subr.mxu0 0.0
    %298 = vmatpush1.msra.mxu0 0.0
    %299 = vmatprep.subr.mxu0 0.0
    %300 = vmatpush1.msra.mxu0 0.0
    %301 = vmatprep.subr.mxu0 0.0
    %302 = vmatpush1.msra.mxu0 0.0
    %303 = vmatprep.subr.mxu0 0.0
    %304 = vmatpush1.msra.mxu0 0.0
    %305 = vmatprep.subr.mxu0 0.0
    %306 = vmatpush1.msra.mxu0 0.0
    %307 = vmatprep.subr.mxu0 0.0
    %308 = vmatpush1.msra.mxu0 0.0
    %309 = vmatprep.subr.mxu0 0.0
    %310 = vmatpush1.msra.mxu0 0.0
    %311 = vmatprep.mubr.f32.mxu0 0.0
    %312 = vmatmul.mubr.f32.gmra.mrb[0].mxu0 %v223
    %v313 = vpop.f32.mrb[0].mxu0
    %v314 = vadd.f32 %v245, %v313
    %v315 = vpop.f32.mrb[0].mxu0
    %316 = vdwg.mxu0
    %v317 = vtanh.pop %v314
    %vm318 = vcmask 15360
    %319 = vst.msk [vmem:[%s7] sm:$0xff] %vm318, %v317
    // Predicated region
    $region34: #{tpu_custom_call.1} parent=1 // pred_check
      _
    $region35: #{tpu_custom_call.1} parent=1 // pred_check_branch
      %321 = sbr.rel (0) target = $region37
    $region36: #{tpu_custom_call.1} parent=1 // pred_region
      _
    $region37: #{tpu_custom_call.1} parent=1 // pred_fallthru
      _
    // Predicated region
    $region38: #{tpu_custom_call.1} parent=1 // pred_check
      _
    $region39: #{tpu_custom_call.1} parent=1 // pred_check_branch
      %323 = sbr.rel (0) target = $region41
    $region40: #{tpu_custom_call.1} parent=1 // pred_region
      _
    $region41: #{tpu_custom_call.1} parent=1 // pred_fallthru
      _
    %324 = vsyncpa [#allocation3], 1

</llo_original>
